<compile_context>
chip_gen: v6e
topology: v6e:2x2x1
jax: 0.10.0
libtpu: 0.0.40
codegen_flags: <defaults>
</compile_context>

<pallas_src>
import math
import functools

import jax
import jax.numpy as jnp
from jax import lax
from jax.experimental import pallas as pl
from jax.experimental.pallas import tpu as pltpu

NEG_INF = float("-inf")
EPS = 1e-12           # F.normalize default eps
EPS_SQ = EPS * EPS    # rsqrt(max(ss, EPS^2)) == 1 / max(sqrt(ss), EPS)


# --------------------------------------------------------------------------
# in-kernel helpers
# --------------------------------------------------------------------------
def _topk_desc(x, k):
    """Top-k values per row of x:(n, m), sorted descending (torch.topk semantics)."""
    n, m = x.shape
    iota = lax.broadcasted_iota(jnp.int32, (n, m), 1)
    cur = x
    cols = []
    for _ in range(k):
        mx = jnp.max(cur, axis=1, keepdims=True)                       # (n, 1)
        first = jnp.min(jnp.where(cur == mx, iota, m), axis=1, keepdims=True)
        cur = jnp.where(iota == first, NEG_INF, cur)                   # drop one occurrence
        cols.append(mx)
    return jnp.concatenate(cols, axis=1)                               # (n, k)


def _pad_last_neg_inf(x, target):
    """Pad the last (lane) axis with -inf up to `target` (static shapes)."""
    m = x.shape[-1]
    if m == target:
        return x
    pad = jnp.full(x.shape[:-1] + (target - m,), NEG_INF, x.dtype)
    return jnp.concatenate([x, pad], axis=-1)


def _mlp_vpu(x, w1, b1, w2, b2):
    """Linear(topk,topk) -> ReLU -> Linear(topk,1), kept on the VPU.
    K = N = topk (~10) is far too small to pay MXU push/pop latency for.
    x:(n, topk) -> (n, 1)."""
    h = jnp.sum(x[:, :, None] * w1[None, :, :], axis=1) + b1           # (n, topk)
    h = jnp.maximum(h, 0.0)
    return jnp.sum(h * w2.reshape(1, -1), axis=1, keepdims=True) + b2  # (n, 1)


# --------------------------------------------------------------------------
# kernel 1: embedding similarity + exp(-cdist/sigma) relation matrices
# --------------------------------------------------------------------------
def _relations_kernel(sigma, img_ref, cap_ref, sim_t2t_ref, i2i_ref, t2t_ref, ic_ref):
    img = img_ref[...]                                   # (n_img, H)
    cap = cap_ref[...]                                   # (n_cap, H)

    # Squared row norms (VPU) + three Gram matrices on the MXU; pdist via
    # d^2 = |x|^2 + |y|^2 - 2 x.y, clamped at 0 before sqrt (perf-review item).
    img_sq = jnp.sum(img * img, axis=1, keepdims=True)   # (n_img, 1)
    cap_sq = jnp.sum(cap * cap, axis=1, keepdims=True)   # (n_cap, 1)

    def dot_t(a, b):
        return lax.dot_general(a, b, (((1,), (1,)), ((), ())),
                               preferred_element_type=jnp.float32)

    cap_img = dot_t(cap, img)                            # (n_cap, n_img) = cap_emb @ img_emb.T
    img_img = dot_t(img, img)                            # (n_img, n_img)
    cap_cap = dot_t(cap, cap)                            # (n_cap, n_cap)

    sim_t2t_ref[...] = cap_img

    inv_sigma = 1.0 / sigma

    def rel(x_sq, y_sq, gram):
        d2 = jnp.maximum(x_sq + y_sq.reshape(1, -1) - 2.0 * gram, 0.0)
        return jnp.exp(-jnp.sqrt(d2) * inv_sigma)

    i2i_ref[...] = rel(img_sq, img_sq, img_img)                   # exp(-cdist(img,img)/sigma)
    t2t_ref[...] = rel(cap_sq, cap_sq, cap_cap)                   # exp(-cdist(cap,cap)/sigma)
    ic_ref[...] = rel(img_sq, cap_sq, jnp.transpose(cap_img))     # exp(-cdist(img,cap)/sigma)


def relations_forward(img_emb, cap_emb, sigma):
    # TODO(synk): for very large batches add a 2-D output tiling grid here;
    # at typical batch sizes the n x n outputs fit VMEM comfortably.
    n_img, _ = img_emb.shape
    n_cap, _ = cap_emb.shape
    out_shape = (
        jax.ShapeDtypeStruct((n_cap, n_img), jnp.float32),  # sim_t2t
        jax.ShapeDtypeStruct((n_img, n_img), jnp.float32),  # i2i relation
        jax.ShapeDtypeStruct((n_cap, n_cap), jnp.float32),  # t2t relation
        jax.ShapeDtypeStruct((n_img, n_cap), jnp.float32),  # exp(-cdist(img,cap))
    )
    return pl.pallas_call(
        functools.partial(_relations_kernel, sigma),
        out_shape=out_shape,
    )(img_emb, cap_emb)


# --------------------------------------------------------------------------
# kernel 2: AdjacencyLearning (grid over caption tiles)
# --------------------------------------------------------------------------
def _adj_learning_kernel(topk, use_bf16, cap_len_ref,
                         cap_ref, img_ref,
                         w1t_ref, b1t_ref, w2t_ref, b2t_ref,
                         w1i_ref, b1i_ref, w2i_ref, b2i_ref,
                         t2i_rel_ref, t2i_mean_ref, i2t_rel_ref, i2t_mean_ref):
    t = pl.program_id(0)
    TC, W, H = cap_ref.shape
    n_img, R, _ = img_ref.shape
    NT = n_img * TC

    # Per-caption word counts from the SMEM-prefetched cap_len.
    seq = jnp.concatenate(
        [jnp.full((1, 1), cap_len_ref[t * TC + c], jnp.int32) for c in range(TC)],
        axis=0)                                              # (TC, 1)
    nsel = jnp.maximum(seq, topk)                            # num_selected_word
    inv_seq = 1.0 / seq.astype(jnp.float32).reshape(1, TC)   # (1, TC)

    # Caption words: zero words that do not exist in the torch slice
    # (index >= num_selected_word), then L2-normalize each word vector (rsqrt).
    w_iota = lax.broadcasted_iota(jnp.int32, (TC, W), 1)
    sel_mask = w_iota < nsel                                 # word < num_selected_word
    seq_mask = w_iota < seq                                  # word < seq_word
    cap = jnp.where(sel_mask[:, :, None], cap_ref[...], 0.0)
    cap = cap * lax.rsqrt(jnp.maximum(jnp.sum(cap * cap, axis=-1, keepdims=True), EPS_SQ))

    img = img_ref[...]                                       # (n_img, R, H), pre-normalized

    # One flat MXU matmul for the whole caption tile:
    # (n_img*R, H) @ (TC*W, H)^T -> (n_img*R, TC*W) -> (n_img, R, TC, W)
    lhs = img.reshape(n_img * R, H)
    rhs = cap.reshape(TC * W, H)
    if use_bf16:
        lhs = lhs.astype(jnp.bfloat16)
        rhs = rhs.astype(jnp.bfloat16)
    sim = lax.dot_general(lhs, rhs, (((1,), (1,)), ((), ())),
                          preferred_element_type=jnp.float32)
    sim = sim.reshape(n_img, R, TC, W)
    sim = jnp.where(sim >= 0, sim, 0.1 * sim)                # leaky_relu(0.1)  (scan=True)

    sim_sq = sim * sim
    seq_mask4 = seq_mask.reshape(1, 1, TC, W)
    sel_mask3 = sel_mask.reshape(1, TC, W)
    seq_mask3 = seq_mask.reshape(1, TC, W)

    # ---- t2i (row) path: L2-normalize over the word dim, max over regions ----
    inv_d1 = lax.rsqrt(jnp.maximum(jnp.sum(sim_sq, axis=3, keepdims=True), EPS_SQ))
    row_sim = jnp.max(sim * inv_d1, axis=1)                  # (n_img, TC, W)
    row_mean = jnp.sum(jnp.where(seq_mask3, row_sim, 0.0), axis=2) * inv_seq   # (n_img, TC)

    # ---- i2t (column) path: L2-normalize over regions, max over words < seq ----
    inv_d2 = lax.rsqrt(jnp.maximum(jnp.sum(sim_sq, axis=1, keepdims=True), EPS_SQ))
    col_sim = jnp.max(jnp.where(seq_mask4, sim * inv_d2, NEG_INF), axis=3)     # (n_img, R, TC)
    col_mean = jnp.mean(col_sim, axis=1)                     # (n_img, TC)
    col_sim = jnp.swapaxes(col_sim, 1, 2)                    # (n_img, TC, R)

    # ---- fused iterative top-k: one serial chain covering both paths ----
    P = max(W, R)
    row_in = _pad_last_neg_inf(jnp.where(sel_mask3, row_sim, NEG_INF), P)
    col_in = _pad_last_neg_inf(col_sim, P)
    both = jnp.concatenate([row_in.reshape(NT, P), col_in.reshape(NT, P)], axis=0)
    both_topk = _topk_desc(both, topk)                       # (2*NT, topk)
    row_topk = both_topk[:NT]
    col_topk = both_topk[NT:]

    # ---- tiny MLP heads (VPU) + residual mean (res=True) ----
    t2i = _mlp_vpu(row_topk, w1t_ref[...], b1t_ref[...], w2t_ref[...], b2t_ref[...])
    i2t = _mlp_vpu(col_topk, w1i_ref[...], b1i_ref[...], w2i_ref[...], b2i_ref[...])
    t2i = t2i.reshape(n_img, TC) + row_mean
    i2t = i2t.reshape(n_img, TC) + col_mean

    # Caption-major, lane-dense (TC, n_img) output blocks (n_img on lanes).
    t2i_rel_ref[...] = jnp.transpose(t2i)
    t2i_mean_ref[...] = jnp.transpose(row_mean)
    i2t_rel_ref[...] = jnp.transpose(i2t)
    i2t_mean_ref[...] = jnp.transpose(col_mean)


def adj_learning_forward(img_regions, cap_words, cap_len, params, topk,
                         use_bf16_matmul=False):
    n_img, R, H = img_regions.shape
    n_cap, W, _ = cap_words.shape
    assert W >= topk and R >= topk, "torch.topk(k=topk) needs W >= topk and R >= topk"

    # Hoisted out of the per-caption grid: img_regions is identical for every
    # caption, so L2-normalize it exactly once here (perf-review item).
    img_n = img_regions * lax.rsqrt(
        jnp.maximum(jnp.sum(img_regions * img_regions, axis=-1, keepdims=True), EPS_SQ))

    # Caption tiling: TC captions per grid step amortizes the ~0.35us per-step
    # overhead and feeds the MXU one (n_img*R) x (TC*W) matmul per step.
    TC = n_cap if n_cap <= 8 else 8
    n_cap_pad = ((n_cap + TC - 1) // TC) * TC
    cap_len = cap_len.astype(jnp.int32)
    if n_cap_pad != n_cap:
        cap_words = jnp.concatenate(
            [cap_words, jnp.zeros((n_cap_pad - n_cap, W, H), cap_words.dtype)], axis=0)
        cap_len = jnp.concatenate(
            [cap_len, jnp.full((n_cap_pad - n_cap,), topk, jnp.int32)], axis=0)

    weight_specs = [
        pl.BlockSpec((topk, topk), lambda t, cl: (0, 0)),
        pl.BlockSpec((1, topk),    lambda t, cl: (0, 0)),
        pl.BlockSpec((topk, 1),    lambda t, cl: (0, 0)),
        pl.BlockSpec((1, 1),       lambda t, cl: (0, 0)),
    ]
    grid_spec = pltpu.PrefetchScalarGridSpec(
        num_scalar_prefetch=1,
        grid=(n_cap_pad // TC,),
        in_specs=[pl.BlockSpec((TC, W, H),    lambda t, cl: (t, 0, 0)),
                  pl.BlockSpec((n_img, R, H), lambda t, cl: (0, 0, 0))]
                 + weight_specs + weight_specs,
        out_specs=[pl.BlockSpec((TC, n_img), lambda t, cl: (t, 0))] * 4,
    )
    out_shape = tuple(jax.ShapeDtypeStruct((n_cap_pad, n_img), jnp.float32)
                      for _ in range(4))

    t2i_rel, t2i_mean, i2t_rel, i2t_mean = pl.pallas_call(
        functools.partial(_adj_learning_kernel, topk, use_bf16_matmul),
        grid_spec=grid_spec,
        out_shape=out_shape,
        compiler_params=pltpu.CompilerParams(
            dimension_semantics=("parallel",),        # captions are independent
            vmem_limit_bytes=48 * 1024 * 1024),       # explicit budget; fits v7x's 64 MiB
    )(cap_len, cap_words, img_n,
      params["w1_t2i"], params["b1_t2i"], params["w2_t2i"], params["b2_t2i"],
      params["w1_i2t"], params["b1_i2t"], params["w2_i2t"], params["b2_i2t"])

    t2i_rel = t2i_rel[:n_cap]          # (n_cap, n_img)  == batch_t2i_relation
    t2i_mean = t2i_mean[:n_cap]        # (n_cap, n_img)  == batch_t2i_mean
    i2t_rel = i2t_rel[:n_cap].T        # (n_img, n_cap)  == batch_i2t_relation
    i2t_mean = i2t_mean[:n_cap].T      # (n_img, n_cap)  == batch_i2t_mean
    return t2i_rel, i2t_rel, t2i_mean, i2t_mean


# --------------------------------------------------------------------------
# AdjacencyModel.forward (glue in plain JAX - tiny n x n ops, not a hot path)
# --------------------------------------------------------------------------
def _kl_div(A, B, T):
    # F.kl_div(log_softmax(A/T), softmax(B/T), reduction='batchmean') * T^2
    # Guarded so underflowed probabilities contribute 0 (torch's 0*log0 == 0).
    log_p_A = jax.nn.log_softmax(A / T, axis=-1)
    p_B = jax.nn.softmax(B / T, axis=-1)
    term = jnp.where(p_B > 0,
                     p_B * (jnp.log(jnp.maximum(p_B, 1e-38)) - log_p_A),
                     0.0)
    return jnp.sum(term) / A.shape[0] * (T ** 2)


def adjacency_model_forward(img_emb, cap_emb, img_regions, cap_words, img_len, cap_len,
                            params, threshold=0.5, topk=10, sigma=1.0, T=1.0,
                            use_bf16_matmul=False):
    del img_len  # img_len_use=False in AdjacencyLearning -> unused
    n_img = img_emb.shape[0]
    n_cap = cap_emb.shape[0]

    sim_t2t, i2i_rel, t2t_rel, sim_ic = relations_forward(img_emb, cap_emb, sigma)
    sim_i2i = sim_t2t.T                                   # img_emb @ cap_emb.T

    kth = lax.top_k(sim_t2t, int(n_cap * threshold))[0][:, -1:]
    t2t_connect = (sim_t2t - kth) >= 0
    kth = lax.top_k(sim_i2i, int(n_img * threshold))[0][:, -1:]
    i2i_connect = (sim_i2i - kth) >= 0

    t2i_rel, i2t_rel, t2i_mean, i2t_mean = adj_learning_forward(
        img_regions, cap_words, cap_len, params, topk,
        use_bf16_matmul=use_bf16_matmul)

    kth = lax.top_k(t2i_mean, int(n_img * threshold))[0][:, -1:]
    t2i_connect = (t2i_mean - kth) >= 0
    kth = lax.top_k(i2t_mean, int(n_cap * threshold))[0][:, -1:]
    i2t_connect = (i2t_mean - kth) >= 0

    # TODO(synk): tiny (n x n) softmax/KL reg-loss kept in plain JAX (not a hot path).
    reg_loss = _kl_div(sim_ic, i2t_rel, T) + _kl_div(sim_ic.T, t2i_rel, T)

    batch_connect = {'i2i': i2i_connect, 't2t': t2t_connect,
                     'i2t': i2t_connect, 't2i': t2i_connect}
    batch_relation = {'i2i': i2i_rel, 't2t': t2t_rel,
                      'i2t': i2t_rel, 't2i': t2i_rel}
    return batch_connect, batch_relation, reg_loss


# --------------------------------------------------------------------------
# main
# --------------------------------------------------------------------------
if __name__ == "__main__":
    n, H, R, W, topk = 4, 32, 16, 16, 10   # n_img == n_cap (required by the module)

    key = jax.random.PRNGKey(0)
    ks = jax.random.split(key, 8)
    img_emb = jax.random.normal(ks[0], (n, H), jnp.float32)
    cap_emb = jax.random.normal(ks[1], (n, H), jnp.float32)
    img_regions = jax.random.normal(ks[2], (n, R, H), jnp.float32)
    cap_words = jax.random.normal(ks[3], (n, W, H), jnp.float32)
    img_len = jnp.full((n,), R, jnp.int32)
    cap_len = jnp.array([12, 8, 16, 10], jnp.int32)   # mixes seq<topk and seq>=topk

    # Deterministic Linear params (PyTorch default: U(-1/sqrt(fan_in), 1/sqrt(fan_in))).
    # mlp_i2t is a deepcopy of mlp_t2i -> identical initial weights.
    bound = 1.0 / math.sqrt(topk)
    w1 = jax.random.uniform(ks[4], (topk, topk), jnp.float32, -bound, bound)  # (out,in)
    b1 = jax.random.uniform(ks[5], (topk,), jnp.float32, -bound, bound)
    w2 = jax.random.uniform(ks[6], (1, topk), jnp.float32, -bound, bound)
    b2 = jax.random.uniform(ks[7], (1,), jnp.float32, -bound, bound)
    params = {
        "w1_t2i": w1.T, "b1_t2i": b1.reshape(1, topk),
        "w2_t2i": w2.T, "b2_t2i": b2.reshape(1, 1),
        "w1_i2t": w1.T, "b1_i2t": b1.reshape(1, topk),
        "w2_i2t": w2.T, "b2_i2t": b2.reshape(1, 1),
    }

    connect, relation, reg_loss = adjacency_model_forward(
        img_emb, cap_emb, img_regions, cap_words, img_len, cap_len,
        params, threshold=0.5, topk=topk, sigma=1.0, T=1.0,
        use_bf16_matmul=False)   # bf16 MXU operands available; off for f32 parity
    jax.block_until_ready((connect, relation, reg_loss))

    assert relation["t2i"].shape == (n, n) and relation["i2t"].shape == (n, n)
    assert relation["i2i"].shape == (n, n) and relation["t2t"].shape == (n, n)
    assert connect["i2i"].dtype == jnp.bool_ and connect["t2i"].shape == (n, n)
    assert bool(jnp.isfinite(reg_loss))
    assert bool(jnp.all(jnp.isfinite(relation["t2i"])))
    assert bool(jnp.all(jnp.isfinite(relation["i2t"])))
    assert bool(jnp.all(jnp.isfinite(relation["i2i"])))
    assert bool(jnp.all(jnp.isfinite(relation["t2t"])))
    print("KERNEL_OK")
</pallas_src>

<mosaic_0001>
module attributes {stable_mosaic.version = 11 : i64} {
  func.func @_relations_kernel(%arg0: memref<4x32xf32, #tpu.memory_space<vmem>>, %arg1: memref<4x32xf32, #tpu.memory_space<vmem>>, %arg2: memref<4x4xf32, #tpu.memory_space<vmem>>, %arg3: memref<4x4xf32, #tpu.memory_space<vmem>>, %arg4: memref<4x4xf32, #tpu.memory_space<vmem>>, %arg5: memref<4x4xf32, #tpu.memory_space<vmem>>) attributes {dimension_semantics = [], scalar_prefetch = 0 : i64, scratch_operands = 0 : i64, tpu.core_type = #tpu.core_type<tc>} {
    %c0 = arith.constant 0 : index
    %c0_0 = arith.constant 0 : index
    %0 = vector.load %arg0[%c0, %c0_0] : memref<4x32xf32, #tpu.memory_space<vmem>>, vector<4x32xf32>
    %c0_1 = arith.constant 0 : index
    %c0_2 = arith.constant 0 : index
    %1 = vector.load %arg1[%c0_1, %c0_2] : memref<4x32xf32, #tpu.memory_space<vmem>>, vector<4x32xf32>
    %2 = arith.mulf %0, %0 : vector<4x32xf32>
    %cst = arith.constant dense<0.000000e+00> : vector<4xf32>
    %3 = vector.multi_reduction <add>, %2, %cst [1] : vector<4x32xf32> to vector<4xf32>
    %4 = vector.shape_cast %3 : vector<4xf32> to vector<4x1xf32>
    %5 = arith.mulf %1, %1 : vector<4x32xf32>
    %cst_3 = arith.constant dense<0.000000e+00> : vector<4xf32>
    %6 = vector.multi_reduction <add>, %5, %cst_3 [1] : vector<4x32xf32> to vector<4xf32>
    %7 = vector.shape_cast %6 : vector<4xf32> to vector<4x1xf32>
    %cst_4 = arith.constant dense<0.000000e+00> : vector<4x4xf32>
    %8 = tpu.matmul %1, %0, %cst_4 {dimension_numbers = #tpu.dot_dimension_numbers<[1], [1], [0], [0], [0, 0, 1, 0], [], []>} : vector<4x32xf32>, vector<4x32xf32>, vector<4x4xf32> -> vector<4x4xf32>
    %cst_5 = arith.constant dense<0.000000e+00> : vector<4x4xf32>
    %9 = tpu.matmul %0, %0, %cst_5 {dimension_numbers = #tpu.dot_dimension_numbers<[1], [1], [0], [0], [0, 0, 1, 0], [], []>} : vector<4x32xf32>, vector<4x32xf32>, vector<4x4xf32> -> vector<4x4xf32>
    %cst_6 = arith.constant dense<0.000000e+00> : vector<4x4xf32>
    %10 = tpu.matmul %1, %1, %cst_6 {dimension_numbers = #tpu.dot_dimension_numbers<[1], [1], [0], [0], [0, 0, 1, 0], [], []>} : vector<4x32xf32>, vector<4x32xf32>, vector<4x4xf32> -> vector<4x4xf32>
    %c0_7 = arith.constant 0 : index
    %c0_8 = arith.constant 0 : index
    %11 = vector.load %arg2[%c0_7, %c0_8] : memref<4x4xf32, #tpu.memory_space<vmem>>, vector<4x4xf32>
    tpu.vector_store %arg2[%c0_7, %c0_8], %8 {strides = array<i32>} : memref<4x4xf32, #tpu.memory_space<vmem>>, vector<4x4xf32>,
    %12 = vector.shape_cast %4 : vector<4x1xf32> to vector<1x4xf32>
    %13 = vector.broadcast %4 : vector<4x1xf32> to vector<4x4xf32>
    %14 = vector.broadcast %12 : vector<1x4xf32> to vector<4x4xf32>
    %15 = arith.addf %13, %14 : vector<4x4xf32>
    %cst_9 = arith.constant 2.000000e+00 : f32
    %16 = vector.broadcast %cst_9 : f32 to vector<4x4xf32>
    %17 = arith.mulf %16, %9 : vector<4x4xf32>
    %18 = arith.subf %15, %17 : vector<4x4xf32>
    %cst_10 = arith.constant 0.000000e+00 : f32
    %19 = vector.broadcast %cst_10 : f32 to vector<4x4xf32>
    %20 = arith.maximumf %18, %19 : vector<4x4xf32>
    %21 = math.sqrt %20 : vector<4x4xf32>
    %cst_11 = arith.constant 0.000000e+00 : f32
    %22 = vector.broadcast %cst_11 : f32 to vector<4x4xf32>
    %23 = arith.subf %22, %21 : vector<4x4xf32>
    %cst_12 = arith.constant 1.000000e+00 : f32
    %24 = vector.broadcast %cst_12 : f32 to vector<4x4xf32>
    %25 = arith.mulf %23, %24 : vector<4x4xf32>
    %26 = math.exp %25 : vector<4x4xf32>
    %c0_13 = arith.constant 0 : index
    %c0_14 = arith.constant 0 : index
    %27 = vector.load %arg3[%c0_13, %c0_14] : memref<4x4xf32, #tpu.memory_space<vmem>>, vector<4x4xf32>
    tpu.vector_store %arg3[%c0_13, %c0_14], %26 {strides = array<i32>} : memref<4x4xf32, #tpu.memory_space<vmem>>, vector<4x4xf32>,
    %28 = vector.shape_cast %7 : vector<4x1xf32> to vector<1x4xf32>
    %29 = vector.broadcast %7 : vector<4x1xf32> to vector<4x4xf32>
    %30 = vector.broadcast %28 : vector<1x4xf32> to vector<4x4xf32>
    %31 = arith.addf %29, %30 : vector<4x4xf32>
    %cst_15 = arith.constant 2.000000e+00 : f32
    %32 = vector.broadcast %cst_15 : f32 to vector<4x4xf32>
    %33 = arith.mulf %32, %10 : vector<4x4xf32>
    %34 = arith.subf %31, %33 : vector<4x4xf32>
    %cst_16 = arith.constant 0.000000e+00 : f32
    %35 = vector.broadcast %cst_16 : f32 to vector<4x4xf32>
    %36 = arith.maximumf %34, %35 : vector<4x4xf32>
    %37 = math.sqrt %36 : vector<4x4xf32>
    %cst_17 = arith.constant 0.000000e+00 : f32
    %38 = vector.broadcast %cst_17 : f32 to vector<4x4xf32>
    %39 = arith.subf %38, %37 : vector<4x4xf32>
    %cst_18 = arith.constant 1.000000e+00 : f32
    %40 = vector.broadcast %cst_18 : f32 to vector<4x4xf32>
    %41 = arith.mulf %39, %40 : vector<4x4xf32>
    %42 = math.exp %41 : vector<4x4xf32>
    %c0_19 = arith.constant 0 : index
    %c0_20 = arith.constant 0 : index
    %43 = vector.load %arg4[%c0_19, %c0_20] : memref<4x4xf32, #tpu.memory_space<vmem>>, vector<4x4xf32>
    tpu.vector_store %arg4[%c0_19, %c0_20], %42 {strides = array<i32>} : memref<4x4xf32, #tpu.memory_space<vmem>>, vector<4x4xf32>,
    %44 = tpu.transpose %8, [1, 0] : vector<4x4xf32> -> vector<4x4xf32>
    %45 = vector.shape_cast %7 : vector<4x1xf32> to vector<1x4xf32>
    %46 = vector.broadcast %4 : vector<4x1xf32> to vector<4x4xf32>
    %47 = vector.broadcast %45 : vector<1x4xf32> to vector<4x4xf32>
    %48 = arith.addf %46, %47 : vector<4x4xf32>
    %cst_21 = arith.constant 2.000000e+00 : f32
    %49 = vector.broadcast %cst_21 : f32 to vector<4x4xf32>
    %50 = arith.mulf %49, %44 : vector<4x4xf32>
    %51 = arith.subf %48, %50 : vector<4x4xf32>
    %cst_22 = arith.constant 0.000000e+00 : f32
    %52 = vector.broadcast %cst_22 : f32 to vector<4x4xf32>
    %53 = arith.maximumf %51, %52 : vector<4x4xf32>
    %54 = math.sqrt %53 : vector<4x4xf32>
    %cst_23 = arith.constant 0.000000e+00 : f32
    %55 = vector.broadcast %cst_23 : f32 to vector<4x4xf32>
    %56 = arith.subf %55, %54 : vector<4x4xf32>
    %cst_24 = arith.constant 1.000000e+00 : f32
    %57 = vector.broadcast %cst_24 : f32 to vector<4x4xf32>
    %58 = arith.mulf %56, %57 : vector<4x4xf32>
    %59 = math.exp %58 : vector<4x4xf32>
    %c0_25 = arith.constant 0 : index
    %c0_26 = arith.constant 0 : index
    %60 = vector.load %arg5[%c0_25, %c0_26] : memref<4x4xf32, #tpu.memory_space<vmem>>, vector<4x4xf32>
    tpu.vector_store %arg5[%c0_25, %c0_26], %59 {strides = array<i32>} : memref<4x4xf32, #tpu.memory_space<vmem>>, vector<4x4xf32>,
    return
  }
}

</mosaic_0001>

<llo_original>
// kernel: tpu_custom_call.1
$region0: #{tpu_custom_call.1}
  #allocation0 [shape = 'u32[]', space=smem, size = 0x4, offset = 0x4, fixed_abs, tag = 'smem constant byte address 0x4 - core index']
  #allocation1 [shape = 'u32[144,128]{1,0:T(1,128)}', space=vmem, size = 0x12000, scoped, tag = 'internal scratch']
  %s0 = inlined_call_operand.hbm [shape: f32[4,32], index: 0, kind: input, shape index: {}]
  %s1 = inlined_call_operand.hbm [shape: f32[4,32], index: 1, kind: input, shape index: {}]
  %s2 = inlined_call_operand.hbm [shape: f32[4,4], index: 2, kind: output, shape index: {0}]
  %s3 = inlined_call_operand.hbm [shape: f32[4,4], index: 3, kind: output, shape index: {1}]
  %s4 = inlined_call_operand.hbm [shape: f32[4,4], index: 4, kind: output, shape index: {2}]
  %s5 = inlined_call_operand.hbm [shape: f32[4,4], index: 5, kind: output, shape index: {3}]
  %6 = xla_tuple %s2, %s3, %s4, %s5
  %s7 = sld [smem:[#allocation0]]
  $region50: #{tpu_custom_call.1} parent=0
    _
  %s9 = ssub.s32 1, %s7
  %s10 = scalar_select 0, %s9, %s7
  $region1: #{tpu_custom_call.1} parent=0
    #allocation2 [shape = 'u8[2048]{0}', space=vmem, size = 0x800, scoped, tag = 'input window, operand 0, single buffered']
    #allocation3 [shape = 's32[1]{0}', space=sflag, size = 0x4, scoped, tag = 'scoped memory for tpu_custom_call.1']
    #allocation4 [shape = 's32[1]{0}', space=sflag, size = 0x4, scoped, tag = 'scoped memory for tpu_custom_call.1']
    #allocation5 [shape = 'u8[2048]{0}', space=vmem, size = 0x800, scoped, tag = 'input window, operand 1, single buffered']
    #allocation6 [shape = 's32[1]{0}', space=sflag, size = 0x4, scoped, tag = 'scoped memory for tpu_custom_call.1']
    #allocation7 [shape = 'u8[2048]{0}', space=vmem, size = 0x800, scoped, tag = 'output window, operand 0, single buffered']
    #allocation8 [shape = 'u8[2048]{0}', space=vmem, size = 0x800, scoped, tag = 'output window, operand 1, single buffered']
    #allocation9 [shape = 's32[1]{0}', space=sflag, size = 0x4, scoped, tag = 'scoped memory for tpu_custom_call.1']
    #allocation10 [shape = 'u8[2048]{0}', space=vmem, size = 0x800, scoped, tag = 'output window, operand 2, single buffered']
    #allocation11 [shape = 'u8[2048]{0}', space=vmem, size = 0x800, scoped, tag = 'output window, operand 3, single buffered']
    #allocation12 [shape = 's32[1]{0}', space=sflag, size = 0x4, scoped, tag = 'scoped memory for tpu_custom_call.1']
    %11 = vsyncpa [#allocation3], 0
    %12 = vsyncpa [#allocation6], 0
    %13 = vsyncpa [#allocation4], 0
    %14 = vsyncpa [#allocation9], 0
    %15 = vsyncpa [#allocation12], 0
    // Predicated region
    $region2: #{tpu_custom_call.1} parent=1 // pred_check
      _
    $region3: #{tpu_custom_call.1} parent=1 // pred_check_branch
      %17 = sbr.rel (0) target = $region5
    $region4: #{tpu_custom_call.1} parent=1 // pred_region
      %s19 = ssub.s32 64, 64
      %20 = vsyncadd [#allocation3], %s19
      %s22 = sshll.u32 [#allocation2], 4
      %s23 = int_to_ptr.vmem [resolvable:$true] %s22
      %25 = dma.hbm_to_vmem [thread:$0]  %s0, 64, %s23, [#allocation3]
    $region5: #{tpu_custom_call.1} parent=1 // pred_fallthru
      _
    // Predicated region
    $region6: #{tpu_custom_call.1} parent=1 // pred_check
      _
    $region7: #{tpu_custom_call.1} parent=1 // pred_check_branch
      %27 = sbr.rel (0) target = $region9
    $region8: #{tpu_custom_call.1} parent=1 // pred_region
      %s29 = ssub.s32 64, 64
      %30 = vsyncadd [#allocation6], %s29
      %s32 = sshll.u32 [#allocation5], 4
      %s33 = int_to_ptr.vmem [resolvable:$true] %s32
      %35 = dma.hbm_to_vmem [thread:$0]  %s1, 64, %s33, [#allocation6]
    $region9: #{tpu_custom_call.1} parent=1 // pred_fallthru
      _
    // Predicated region
    $region10: #{tpu_custom_call.1} parent=1 // pred_check
      _
    $region11: #{tpu_custom_call.1} parent=1 // pred_check_branch
      %37 = sbr.rel (0) target = $region13
    $region12: #{tpu_custom_call.1} parent=1 // pred_region
      %38 = dma.done [#allocation3], 64
    $region13: #{tpu_custom_call.1} parent=1 // pred_fallthru
      _
    // Predicated region
    $region14: #{tpu_custom_call.1} parent=1 // pred_check
      _
    $region15: #{tpu_custom_call.1} parent=1 // pred_check_branch
      %40 = sbr.rel (0) target = $region17
    $region16: #{tpu_custom_call.1} parent=1 // pred_region
      %41 = dma.done [#allocation6], 64
    $region17: #{tpu_custom_call.1} parent=1 // pred_fallthru
      _
    %v42 = vld [vmem:[#allocation2] sm:$0xf]
    %v43 = vld [vmem:[#allocation5] sm:$0xf]
    %v44 = vmul.f32 %v42, %v42
    %vm45 = vcmask 257024
    %v46 = vsel %vm45, %v44, 0.0
    %47 = vadd.xlane.f32.xlu0 %v46
    %v48 = vpop.xlane.xlu0 %47
    %v49 = vmul.f32 %v43, %v43
    %v50 = vsel %vm45, %v49, 0.0
    %51 = vadd.xlane.f32.xlu0 %v50
    %v52 = vpop.xlane.xlu0 %51
    %vm53 = vcmask 261120
    %v55 = vsel %vm53, %v43, 0
    %v58 = vsel %vm53, %v42, 0
    %60 = vmatprep.subr.mxu0 0.0
    %61 = vmatpush1.xpose.msra.mxu0 0.0
    %62 = vmatprep.subr.mxu0 0.0
    %63 = vmatpush1.xpose.msra.mxu0 0.0
    %64 = vmatprep.subr.mxu0 0.0
    %65 = vmatpush1.xpose.msra.mxu0 0.0
    %66 = vmatprep.subr.mxu0 0.0
    %67 = vmatpush1.xpose.msra.mxu0 0.0
    %68 = vmatprep.subr.mxu0 0.0
    %69 = vmatpush1.xpose.msra.mxu0 0.0
    %70 = vmatprep.subr.mxu0 0.0
    %71 = vmatpush1.xpose.msra.mxu0 0.0
    %72 = vmatprep.subr.mxu0 0.0
    %73 = vmatpush1.xpose.msra.mxu0 0.0
    %74 = vmatprep.subr.mxu0 0.0
    %75 = vmatpush1.xpose.msra.mxu0 0.0
    %76 = vmatprep.subr.mxu0 0.0
    %77 = vmatpush1.xpose.msra.mxu0 0.0
    %78 = vmatprep.subr.mxu0 0.0
    %79 = vmatpush1.xpose.msra.mxu0 0.0
    %80 = vmatprep.subr.mxu0 0.0
    %81 = vmatpush1.xpose.msra.mxu0 0.0
    %82 = vmatprep.subr.mxu0 0.0
    %83 = vmatpush1.xpose.msra.mxu0 0.0
    %84 = vmatprep.subr.mxu0 0.0
    %85 = vmatpush1.xpose.msra.mxu0 0.0
    %86 = vmatprep.subr.mxu0 0.0
    %87 = vmatpush1.xpose.msra.mxu0 0.0
    %88 = vmatprep.subr.mxu0 0.0
    %89 = vmatpush1.xpose.msra.mxu0 0.0
    %90 = vmatprep.subr.mxu0 0.0
    %91 = vmatpush1.xpose.msra.mxu0 %v58
    %92 = vmatprep.subr.mxu0 0.0
    %93 = vmatpush2.xpose.msra.mxu0 0.0
    %94 = vmatprep.subr.mxu0 0.0
    %95 = vmatpush2.xpose.msra.mxu0 0.0
    %96 = vmatprep.subr.mxu0 0.0
    %97 = vmatpush2.xpose.msra.mxu0 0.0
    %98 = vmatprep.subr.mxu0 0.0
    %99 = vmatpush2.xpose.msra.mxu0 0.0
    %100 = vmatprep.subr.mxu0 0.0
    %101 = vmatpush2.xpose.msra.mxu0 0.0
    %102 = vmatprep.subr.mxu0 0.0
    %103 = vmatpush2.xpose.msra.mxu0 0.0
    %104 = vmatprep.subr.mxu0 0.0
    %105 = vmatpush2.xpose.msra.mxu0 0.0
    %106 = vmatprep.subr.mxu0 0.0
    %107 = vmatpush2.xpose.msra.mxu0 0.0
    %108 = vmatprep.subr.mxu0 0.0
    %109 = vmatpush2.xpose.msra.mxu0 0.0
    %110 = vmatprep.subr.mxu0 0.0
    %111 = vmatpush2.xpose.msra.mxu0 0.0
    %112 = vmatprep.subr.mxu0 0.0
    %113 = vmatpush2.xpose.msra.mxu0 0.0
    %114 = vmatprep.subr.mxu0 0.0
    %115 = vmatpush2.xpose.msra.mxu0 0.0
    %116 = vmatprep.subr.mxu0 0.0
    %117 = vmatpush2.xpose.msra.mxu0 0.0
    %118 = vmatprep.subr.mxu0 0.0
    %119 = vmatpush2.xpose.msra.mxu0 0.0
    %120 = vmatprep.subr.mxu0 0.0
    %121 = vmatpush2.xpose.msra.mxu0 0.0
    %122 = vmatprep.subr.mxu0 0.0
    %123 = vmatpush2.xpose.msra.mxu0 0.0
    %124 = vmatprep.mubr.f32.mxu0 0.0
    %125 = vmatmul.mubr.f32.gmra.mxu0 %v55
    %v126 = vpop.f32.mrf.mxu0
    %v127 = vadd.f32 0.0, %v126
    %v128 = vpop.f32.mrf.mxu0
    %129 = vdwg.mxu0
    %130 = vmatprep.subr.mxu0 0.0
    %131 = vmatpush1.xpose.msra.mxu0 0.0
    %132 = vmatprep.subr.mxu0 0.0
    %133 = vmatpush1.xpose.msra.mxu0 0.0
    %134 = vmatprep.subr.mxu0 0.0
    %135 = vmatpush1.xpose.msra.mxu0 0.0
    %136 = vmatprep.subr.mxu0 0.0
    %137 = vmatpush1.xpose.msra.mxu0 0.0
    %138 = vmatprep.subr.mxu0 0.0
    %139 = vmatpush1.xpose.msra.mxu0 0.0
    %140 = vmatprep.subr.mxu0 0.0
    %141 = vmatpush1.xpose.msra.mxu0 0.0
    %142 = vmatprep.subr.mxu0 0.0
    %143 = vmatpush1.xpose.msra.mxu0 0.0
    %144 = vmatprep.subr.mxu0 0.0
    %145 = vmatpush1.xpose.msra.mxu0 0.0
    %146 = vmatprep.subr.mxu0 0.0
    %147 = vmatpush1.xpose.msra.mxu0 0.0
    %148 = vmatprep.subr.mxu0 0.0
    %149 = vmatpush1.xpose.msra.mxu0 0.0
    %150 = vmatprep.subr.mxu0 0.0
    %151 = vmatpush1.xpose.msra.mxu0 0.0
    %152 = vmatprep.subr.mxu0 0.0
    %153 = vmatpush1.xpose.msra.mxu0 0.0
    %154 = vmatprep.subr.mxu0 0.0
    %155 = vmatpush1.xpose.msra.mxu0 0.0
    %156 = vmatprep.subr.mxu0 0.0
    %157 = vmatpush1.xpose.msra.mxu0 0.0
    %158 = vmatprep.subr.mxu0 0.0
    %159 = vmatpush1.xpose.msra.mxu0 0.0
    %160 = vmatprep.subr.mxu0 0.0
    %161 = vmatpush1.xpose.msra.mxu0 %v58
    %162 = vmatprep.subr.mxu0 0.0
    %163 = vmatpush2.xpose.msra.mxu0 0.0
    %164 = vmatprep.subr.mxu0 0.0
    %165 = vmatpush2.xpose.msra.mxu0 0.0
    %166 = vmatprep.subr.mxu0 0.0
    %167 = vmatpush2.xpose.msra.mxu0 0.0
    %168 = vmatprep.subr.mxu0 0.0
    %169 = vmatpush2.xpose.msra.mxu0 0.0
    %170 = vmatprep.subr.mxu0 0.0
    %171 = vmatpush2.xpose.msra.mxu0 0.0
    %172 = vmatprep.subr.mxu0 0.0
    %173 = vmatpush2.xpose.msra.mxu0 0.0
    %174 = vmatprep.subr.mxu0 0.0
    %175 = vmatpush2.xpose.msra.mxu0 0.0
    %176 = vmatprep.subr.mxu0 0.0
    %177 = vmatpush2.xpose.msra.mxu0 0.0
    %178 = vmatprep.subr.mxu0 0.0
    %179 = vmatpush2.xpose.msra.mxu0 0.0
    %180 = vmatprep.subr.mxu0 0.0
    %181 = vmatpush2.xpose.msra.mxu0 0.0
    %182 = vmatprep.subr.mxu0 0.0
    %183 = vmatpush2.xpose.msra.mxu0 0.0
    %184 = vmatprep.subr.mxu0 0.0
    %185 = vmatpush2.xpose.msra.mxu0 0.0
    %186 = vmatprep.subr.mxu0 0.0
    %187 = vmatpush2.xpose.msra.mxu0 0.0
    %188 = vmatprep.subr.mxu0 0.0
    %189 = vmatpush2.xpose.msra.mxu0 0.0
    %190 = vmatprep.subr.mxu0 0.0
    %191 = vmatpush2.xpose.msra.mxu0 0.0
    %192 = vmatprep.subr.mxu0 0.0
    %193 = vmatpush2.xpose.msra.mxu0 0.0
    %194 = vmatprep.mubr.f32.mxu0 0.0
    %195 = vmatmul.mubr.f32.gmra.mxu0 %v58
    %v196 = vpop.f32.mrf.mxu0
    %v197 = vadd.f32 0.0, %v196
    %v198 = vpop.f32.mrf.mxu0
    %199 = vdwg.mxu0
    %200 = vmatprep.subr.mxu0 0.0
    %201 = vmatpush1.xpose.msra.mxu0 0.0
    %202 = vmatprep.subr.mxu0 0.0
    %203 = vmatpush1.xpose.msra.mxu0 0.0
    %204 = vmatprep.subr.mxu0 0.0
    %205 = vmatpush1.xpose.msra.mxu0 0.0
    %206 = vmatprep.subr.mxu0 0.0
    %207 = vmatpush1.xpose.msra.mxu0 0.0
    %208 = vmatprep.subr.mxu0 0.0
    %209 = vmatpush1.xpose.msra.mxu0 0.0
    %210 = vmatprep.subr.mxu0 0.0
    %211 = vmatpush1.xpose.msra.mxu0 0.0
    %212 = vmatprep.subr.mxu0 0.0
    %213 = vmatpush1.xpose.msra.mxu0 0.0
    %214 = vmatprep.subr.mxu0 0.0
    %215 = vmatpush1.xpose.msra.mxu0 0.0
    %216 = vmatprep.subr.mxu0 0.0
    %217 = vmatpush1.xpose.msra.mxu0 0.0
    %218 = vmatprep.subr.mxu0 0.0
    %219 = vmatpush1.xpose.msra.mxu0 0.0
    %220 = vmatprep.subr.mxu0 0.0
    %221 = vmatpush1.xpose.msra.mxu0 0.0
    %222 = vmatprep.subr.mxu0 0.0
    %223 = vmatpush1.xpose.msra.mxu0 0.0
    %224 = vmatprep.subr.mxu0 0.0
    %225 = vmatpush1.xpose.msra.mxu0 0.0
    %226 = vmatprep.subr.mxu0 0.0
    %227 = vmatpush1.xpose.msra.mxu0 0.0
    %228 = vmatprep.subr.mxu0 0.0
    %229 = vmatpush1.xpose.msra.mxu0 0.0
    %230 = vmatprep.subr.mxu0 0.0
    %231 = vmatpush1.xpose.msra.mxu0 %v55
    %232 = vmatprep.subr.mxu0 0.0
    %233 = vmatpush2.xpose.msra.mxu0 0.0
    %234 = vmatprep.subr.mxu0 0.0
    %235 = vmatpush2.xpose.msra.mxu0 0.0
    %236 = vmatprep.subr.mxu0 0.0
    %237 = vmatpush2.xpose.msra.mxu0 0.0
    %238 = vmatprep.subr.mxu0 0.0
    %239 = vmatpush2.xpose.msra.mxu0 0.0
    %240 = vmatprep.subr.mxu0 0.0
    %241 = vmatpush2.xpose.msra.mxu0 0.0
    %242 = vmatprep.subr.mxu0 0.0
    %243 = vmatpush2.xpose.msra.mxu0 0.0
    %244 = vmatprep.subr.mxu0 0.0
    %245 = vmatpush2.xpose.msra.mxu0 0.0
    %246 = vmatprep.subr.mxu0 0.0
    %247 = vmatpush2.xpose.msra.mxu0 0.0
    %248 = vmatprep.subr.mxu0 0.0
    %249 = vmatpush2.xpose.msra.mxu0 0.0
    %250 = vmatprep.subr.mxu0 0.0
    %251 = vmatpush2.xpose.msra.mxu0 0.0
    %252 = vmatprep.subr.mxu0 0.0
    %253 = vmatpush2.xpose.msra.mxu0 0.0
    %254 = vmatprep.subr.mxu0 0.0
    %255 = vmatpush2.xpose.msra.mxu0 0.0
    %256 = vmatprep.subr.mxu0 0.0
    %257 = vmatpush2.xpose.msra.mxu0 0.0
    %258 = vmatprep.subr.mxu0 0.0
    %259 = vmatpush2.xpose.msra.mxu0 0.0
    %260 = vmatprep.subr.mxu0 0.0
    %261 = vmatpush2.xpose.msra.mxu0 0.0
    %262 = vmatprep.subr.mxu0 0.0
    %263 = vmatpush2.xpose.msra.mxu0 0.0
    %264 = vmatprep.mubr.f32.mxu0 0.0
    %265 = vmatmul.mubr.f32.gmra.mxu0 %v55
    %v266 = vpop.f32.mrf.mxu0
    %v267 = vadd.f32 0.0, %v266
    %v268 = vpop.f32.mrf.mxu0
    %269 = vdwg.mxu0
    %vm270 = vcmask 27648
    %271 = vst.msk [vmem:[#allocation7] sm:$0xf] %vm270, %v127
    %v273 = vlaneseq
    %v274 = vand.u32 %v273, 127
    %v275 = vlaneseq
    %v276 = vshrl.u32 %v275, 7
    %v277 = vsub.s32 %v274, %v276
    %v278 = vrot.slane %v48, %v277
    %vm279 = vcmask 1042434
    %v280 = vsel %vm279, %v278, %v278
    %vm281 = vcmask 1043459
    %v282 = vsel %vm281, %v278, %v280
    %v284 = vadd.f32 %v48, %v282
    %v285 = vmul.f32 %v197, 2.0
    %v286 = vsub.f32 %v284, %v285
    %v287 = vmax.f32 %v286, 0.0
    %v288 = vrsqrt.pop %v287
    %v289 = vmul.f32 %v287, %v288
    %vm290 = vcmp.eq.f32.partialorder %v287, inf
    %v291 = vsel %vm290, %v287, %v289
    %vm292 = vcmp.eq.f32.partialorder %v287, 0.0
    %v293 = vand.u32 %v287, 2147483648
    %v294 = vsel %vm292, %v293, %v291
    %v295 = vsub.f32 0.0, %v294
    %v296 = vmul.f32 %v295, 1.442695
    %v297 = vpow.pop %v296
    %298 = vst.msk [vmem:[#allocation8] sm:$0xf] %vm270, %v297
    %v300 = vlaneseq
    %v301 = vshrl.u32 %v300, 7
    %v302 = vsub.s32 %v274, %v301
    %v303 = vrot.slane %v52, %v302
    %v304 = vsel %vm279, %v303, %v303
    %v305 = vsel %vm281, %v303, %v304
    %v307 = vadd.f32 %v52, %v305
    %v308 = vmul.f32 %v267, 2.0
    %v309 = vsub.f32 %v307, %v308
    %v310 = vmax.f32 %v309, 0.0
    %v311 = vrsqrt.pop %v310
    %v312 = vmul.f32 %v310, %v311
    %vm313 = vcmp.eq.f32.partialorder %v310, inf
    %v314 = vsel %vm313, %v310, %v312
    %vm315 = vcmp.eq.f32.partialorder %v310, 0.0
    %v316 = vand.u32 %v310, 2147483648
    %v317 = vsel %vm315, %v316, %v314
    %v318 = vsub.f32 0.0, %v317
    %v319 = vmul.f32 %v318, 1.442695
    %v320 = vpow.pop %v319
    %321 = vst.msk [vmem:[#allocation10] sm:$0xf] %vm270, %v320
    %322 = vxpose.xlu0.b32.start [1/16] %v127, 128
    %323 = vxpose.xlu0.b32.cont [2/16] 0.0, 128
    %324 = vxpose.xlu0.b32.cont [3/16] 0.0, 128
    %325 = vxpose.xlu0.b32.cont [4/16] 0.0, 128
    %326 = vxpose.xlu0.b32.cont [5/16] 0.0, 128
    %327 = vxpose.xlu0.b32.cont [6/16] 0.0, 128
    %328 = vxpose.xlu0.b32.cont [7/16] 0.0, 128
    %329 = vxpose.xlu0.b32.cont [8/16] 0.0, 128
    %330 = vxpose.xlu0.b32.cont [9/16] 0.0, 128
    %331 = vxpose.xlu0.b32.cont [10/16] 0.0, 128
    %332 = vxpose.xlu0.b32.cont [11/16] 0.0, 128
    %333 = vxpose.xlu0.b32.cont [12/16] 0.0, 128
    %334 = vxpose.xlu0.b32.cont [13/16] 0.0, 128
    %335 = vxpose.xlu0.b32.cont [14/16] 0.0, 128
    %336 = vxpose.xlu0.b32.cont [15/16] 0.0, 128
    %337 = vxpose.xlu0.b32.end [16/16] 0.0, 128
    %v338 = vpop.trf.xlu0
    %v339 = vpop.trf.xlu0
    %v340 = vpop.trf.xlu0
    %v341 = vpop.trf.xlu0
    %v342 = vpop.trf.xlu0
    %v343 = vpop.trf.xlu0
    %v344 = vpop.trf.xlu0
    %v345 = vpop.trf.xlu0
    %v346 = vpop.trf.xlu0
    %v347 = vpop.trf.xlu0
    %v348 = vpop.trf.xlu0
    %v349 = vpop.trf.xlu0
    %v350 = vpop.trf.xlu0
    %v351 = vpop.trf.xlu0
    %v352 = vpop.trf.xlu0
    %v353 = vpop.trf.xlu0
    %v354 = vadd.f32 %v48, %v305
    %v355 = vmul.f32 %v338, 2.0
    %v356 = vsub.f32 %v354, %v355
    %v357 = vmax.f32 %v356, 0.0
    %v358 = vrsqrt.pop %v357
    %v359 = vmul.f32 %v357, %v358
    %vm360 = vcmp.eq.f32.partialorder %v357, inf
    %v361 = vsel %vm360, %v357, %v359
    %vm362 = vcmp.eq.f32.partialorder %v357, 0.0
    %v363 = vand.u32 %v357, 2147483648
    %v364 = vsel %vm362, %v363, %v361
    %v365 = vsub.f32 0.0, %v364
    %v366 = vmul.f32 %v365, 1.442695
    %v367 = vpow.pop %v366
    %368 = vst.msk [vmem:[#allocation11] sm:$0xf] %vm270, %v367
    // Predicated region
    $region18: #{tpu_custom_call.1} parent=1 // pred_check
      _
    $region19: #{tpu_custom_call.1} parent=1 // pred_check_branch
      %370 = sbr.rel (0) target = $region21
    $region20: #{tpu_custom_call.1} parent=1 // pred_region
      %s372 = ssub.s32 64, 64
      %373 = vsyncadd [#allocation4], %s372
      %s375 = sshll.u32 [#allocation7], 4
      %s376 = int_to_ptr.vmem [resolvable:$true] %s375
      %378 = dma.vmem_to_hbm [thread:$0]  %s376, 64, %s2, [#allocation4]
    $region21: #{tpu_custom_call.1} parent=1 // pred_fallthru
      _
    // Predicated region
    $region22: #{tpu_custom_call.1} parent=1 // pred_check
      _
    $region23: #{tpu_custom_call.1} parent=1 // pred_check_branch
      %380 = sbr.rel (0) target = $region25
    $region24: #{tpu_custom_call.1} parent=1 // pred_region
      %s382 = ssub.s32 64, 64
      %383 = vsyncadd [#allocation9], %s382
      %s385 = sshll.u32 [#allocation8], 4
      %s386 = int_to_ptr.vmem [resolvable:$true] %s385
      %388 = dma.vmem_to_hbm [thread:$0]  %s386, 64, %s3, [#allocation9]
    $region25: #{tpu_custom_call.1} parent=1 // pred_fallthru
      _
    // Predicated region
    $region26: #{tpu_custom_call.1} parent=1 // pred_check
      _
    $region27: #{tpu_custom_call.1} parent=1 // pred_check_branch
      %390 = sbr.rel (0) target = $region29
    $region28: #{tpu_custom_call.1} parent=1 // pred_region
      %s392 = ssub.s32 64, 64
      %393 = vsyncadd [#allocation9], %s392
      %s395 = sshll.u32 [#allocation10], 4
      %s396 = int_to_ptr.vmem [resolvable:$true] %s395
      %398 = dma.vmem_to_hbm [thread:$0]  %s396, 64, %s4, [#allocation9]
    $region29: #{tpu_custom_call.1} parent=1 // pred_fallthru
      _
    // Predicated region
    $region30: #{tpu_custom_call.1} parent=1 // pred_check
      _
    $region31: #{tpu_custom_call.1} parent=1 // pred_check_branch
      %400 = sbr.rel (0) target = $region33
    $region32: #{tpu_custom_call.1} parent=1 // pred_region
      %s402 = ssub.s32 64, 64
      %403 = vsyncadd [#allocation12], %s402
      %s405 = sshll.u32 [#allocation11], 4
      %s406 = int_to_ptr.vmem [resolvable:$true] %s405
      %408 = dma.vmem_to_hbm [thread:$0]  %s406, 64, %s5, [#allocation12]
    $region33: #{tpu_custom_call.1} parent=1 // pred_fallthru
      _
    // Predicated region
    $region34: #{tpu_custom_call.1} parent=1 // pred_check
      _
    $region35: #{tpu_custom_call.1} parent=1 // pred_check_branch
      %410 = sbr.rel (0) target = $region37
    $region36: #{tpu_custom_call.1} parent=1 // pred_region
      %411 = dma.done [#allocation4], 64
    $region37: #{tpu_custom_call.1} parent=1 // pred_fallthru
      _
    // Predicated region
    $region38: #{tpu_custom_call.1} parent=1 // pred_check
      _
    $region39: #{tpu_custom_call.1} parent=1 // pred_check_branch
      %413 = sbr.rel (0) target = $region41
    $region40: #{tpu_custom_call.1} parent=1 // pred_region
      %414 = dma.done [#allocation9], 64
    $region41: #{tpu_custom_call.1} parent=1 // pred_fallthru
      _
    // Predicated region
    $region42: #{tpu_custom_call.1} parent=1 // pred_check
      _
    $region43: #{tpu_custom_call.1} parent=1 // pred_check_branch
      %416 = sbr.rel (0) target = $region45
    $region44: #{tpu_custom_call.1} parent=1 // pred_region
      %417 = dma.done [#allocation9], 64
    $region45: #{tpu_custom_call.1} parent=1 // pred_fallthru
      _
    // Predicated region
    $region46: #{tpu_custom_call.1} parent=1 // pred_check
      _
    $region47: #{tpu_custom_call.1} parent=1 // pred_check_branch
      %419 = sbr.rel (0) target = $region49
    $region48: #{tpu_custom_call.1} parent=1 // pred_region
      %420 = dma.done [#allocation12], 64
    $region49: #{tpu_custom_call.1} parent=1 // pred_fallthru
      _
    %421 = vsyncpa [#allocation3], 1
    %422 = vsyncpa [#allocation6], 1
    %423 = vsyncpa [#allocation4], 1
    %424 = vsyncpa [#allocation9], 1
    %425 = vsyncpa [#allocation12], 1

</llo_original>
